<compile_context>
chip_gen: v7x
topology: tpu7x:2x2x1
jax: 0.10.0
libtpu: 0.0.40
codegen_flags: <defaults>
</compile_context>

<pallas_src>
import functools
import math

import jax
import jax.numpy as jnp
from jax.experimental import pallas as pl
from jax.experimental.pallas import tpu as pltpu


VMEM_LIMIT = 32 * 1024 * 1024  # conservative headroom under v7x's 64 MiB physical VMEM


# ----------------------------------------------------------------------------
# Small helpers
# ----------------------------------------------------------------------------
def _sigmoid(x):
    return 1.0 / (1.0 + jnp.exp(-x))


def _softplus(x):
    return jnp.maximum(x, 0.0) + jnp.log1p(jnp.exp(-jnp.abs(x)))


def _pick_tile(L, cap=512):
    # tile for per-token kernels: must divide L and be a multiple of 8 (or equal L)
    if L <= cap:
        return L
    t = cap - (cap % 8)
    while t >= 8:
        if L % t == 0:
            return t
        t -= 8
    return L


def _pick_chunk(L, n_state, d_inner, budget=8 * 1024 * 1024):
    # scan chunk: divides L; sized so the 6 f32 (chunk, N, Din) scratch arrays stay <= budget
    per_row = 24 * n_state * max(d_inner, 1) + 64
    cap = max(8, budget // per_row)
    cap = min(cap, 1024, L)
    t = cap - (cap % 8)
    while t >= 8:
        if L % t == 0:
            return t
        t -= 8
    for t in range(min(cap, L), 0, -1):
        if L % t == 0:
            return t
    return L


# ----------------------------------------------------------------------------
# Kernel 1: LayerNorm(x0) + LayerNorm(x1) + in_proj (fused)
#   Emits one lane-dense (tl, 2*Din) bf16 block (xm | z) plus the extra-emb projection.
# ----------------------------------------------------------------------------
def _pre_kernel(x0_ref, x1_ref, g0_ref, b0_ref, g1_ref, b1_ref, w0_ref, w1_ref,
                xz_ref, xe_ref):
    def ln(xr, g_ref, b_ref):
        x = xr[0].astype(jnp.float32)                      # (TL, C)
        mu = jnp.mean(x, axis=-1, keepdims=True)
        xc = x - mu
        var = jnp.mean(xc * xc, axis=-1, keepdims=True)
        y = xc * jax.lax.rsqrt(var + 1e-5) * g_ref[...] + b_ref[...]
        return y.astype(jnp.bfloat16)

    x0n = ln(x0_ref, g0_ref, b0_ref)
    x1n = ln(x1_ref, g1_ref, b1_ref)
    xz_ref[0] = jnp.dot(x0n, w0_ref[...],
                        preferred_element_type=jnp.float32).astype(xz_ref.dtype)
    xe_ref[0] = jnp.dot(x1n, w1_ref[...],
                        preferred_element_type=jnp.float32).astype(xe_ref.dtype)


def fused_norm_inproj(x0, x1, params, tl):
    B, L, C = x0.shape
    Din = params["dim"]
    nlt = L // tl
    seq_in = pl.BlockSpec((1, tl, C), lambda i, j: (i, j, 0))
    vec = pl.BlockSpec((1, C), lambda i, j: (0, 0))
    return pl.pallas_call(
        _pre_kernel,
        out_shape=(jax.ShapeDtypeStruct((B, L, 2 * Din), jnp.bfloat16),
                   jax.ShapeDtypeStruct((B, L, Din), jnp.bfloat16)),
        grid=(B, nlt),
        in_specs=[seq_in, seq_in, vec, vec, vec, vec,
                  pl.BlockSpec((C, 2 * Din), lambda i, j: (0, 0)),
                  pl.BlockSpec((C, Din), lambda i, j: (0, 0))],
        out_specs=(pl.BlockSpec((1, tl, 2 * Din), lambda i, j: (i, j, 0)),
                   pl.BlockSpec((1, tl, Din), lambda i, j: (i, j, 0))),
        compiler_params=pltpu.CompilerParams(
            dimension_semantics=("parallel", "parallel"),
            vmem_limit_bytes=VMEM_LIMIT),
    )(x0, x1,
      params["norm0_g"].reshape(1, C), params["norm0_b"].reshape(1, C),
      params["norm1_g"].reshape(1, C), params["norm1_b"].reshape(1, C),
      params["in_proj_w"], params["in_proj_e_w"])


# ----------------------------------------------------------------------------
# Kernel 2: bidirectional Mamba core, streamed over L-chunks.
#   grid = (B, n_chunks): forward direction consumes chunk `c`, backward consumes chunk
#   `n_chunks-1-c` in the same grid step.  Scan states and (K-1)-row conv halos persist in
#   VMEM scratch across grid steps (reset at c == 0).  Both recurrences are interleaved in
#   one unrolled fori_loop over dense (N, Din) rows.
# ----------------------------------------------------------------------------
def _mamba_bidir_kernel(xzf_ref, xzb_ref, xef_ref, xeb_ref,
                        cw_ref, cb_ref, cew_ref, ceb_ref,
                        w_ref, dtb_ref, at_ref, dv_ref, nw_ref,
                        yf_ref, yb_ref,
                        dAf, dBuf, hsf, dAb, dBub, hsb,
                        state, halo_m, halo_e,
                        *, n_state, d_conv, alpha):
    CH = yf_ref.shape[1]
    Din = yf_ref.shape[2]
    N = n_state
    K = d_conv
    ci = pl.program_id(1)

    @pl.when(ci == 0)
    def _init():
        state[...] = jnp.zeros_like(state)
        halo_m[...] = jnp.zeros_like(halo_m)
        halo_e[...] = jnp.zeros_like(halo_e)

    def silu(v):
        return v * _sigmoid(v)

    def conv_silu(pad, w, b, offs):
        # depthwise conv via K static shifted slices of the halo-padded chunk, then SiLU
        acc = b
        for k in range(K):
            o = offs[k]
            acc = acc + w[k:k + 1, :] * pad[o:o + CH, :]
        return silu(acc)

    def prep(d_idx, xz_ref, xe_ref, dA_s, dBu_s, reverse):
        xm_c = xz_ref[0, :, :Din].astype(jnp.float32)      # (CH, Din)
        xe_c = xe_ref[0].astype(jnp.float32)               # (CH, Din)
        hm = halo_m[d_idx]                                 # (K-1, Din), from neighbor chunk
        he = halo_e[d_idx]
        if reverse:
            pad_m = jnp.concatenate([xm_c, hm], axis=0)    # anti-causal: needs rows after
            pad_e = jnp.concatenate([xe_c, he], axis=0)
            offs = [K - 1 - k for k in range(K)]
        else:
            pad_m = jnp.concatenate([hm, xm_c], axis=0)    # causal: needs rows before
            pad_e = jnp.concatenate([he, xe_c], axis=0)
            offs = list(range(K))
        # save halo rows for the chunk processed at the next grid step
        halo_m[d_idx] = xm_c[:K - 1, :] if reverse else xm_c[CH - (K - 1):, :]
        halo_e[d_idx] = xe_c[:K - 1, :] if reverse else xe_c[CH - (K - 1):, :]

        xc = conv_silu(pad_m, cw_ref[d_idx], cb_ref[d_idx], offs)
        ec = conv_silu(pad_e, cew_ref[d_idx], ceb_ref[d_idx], offs)
        u = xc + ec if alpha == 1.0 else xc + alpha * ec   # cross-fusion with extra_emb

        # one fused MXU matmul producing [dt_pre | B | C]  (dt_proj folded in, exact)
        proj = jnp.dot(u.astype(jnp.bfloat16), w_ref[d_idx],
                       preferred_element_type=jnp.float32)  # (CH, Din + 2N)
        dt = _softplus(proj[:, :Din] + dtb_ref[d_idx])       # (CH, Din)
        b_c = proj[:, Din:Din + N]                            # (CH, N)
        c_c = proj[:, Din + N:]                               # (CH, N)

        du = dt * u
        at = at_ref[d_idx]                                    # (N, Din), negative
        # per-state construction with 2-D lane-dense ops; scan rows stay dense (N, Din)
        for n in range(N):
            dA_s[:, n, :] = jnp.exp(dt * at[n:n + 1, :])
            dBu_s[:, n, :] = b_c[:, n:n + 1] * du
        return u, c_c

    u_f, c_f = prep(0, xzf_ref, xef_ref, dAf, dBuf, False)
    u_b, c_b = prep(1, xzb_ref, xeb_ref, dAb, dBub, True)

    def step(l, carry):
        h_f, h_b = carry
        lb = CH - 1 - l
        h_f = dAf[l] * h_f + dBuf[l]          # dense (N, Din) FMA
        h_b = dAb[lb] * h_b + dBub[lb]
        hsf[l] = h_f
        hsb[lb] = h_b
        return h_f, h_b

    h_f, h_b = jax.lax.fori_loop(0, CH, step, (state[0], state[1]), unroll=8)
    state[0] = h_f
    state[1] = h_b

    def finish(d_idx, u, c_c, xz_ref, hs_s, y_ref):
        y = dv_ref[d_idx] * u
        for n in range(N):
            y = y + c_c[:, n:n + 1] * hs_s[:, n, :]
        z_c = xz_ref[0, :, Din:].astype(jnp.float32)
        g = y * silu(z_c)
        ms = jnp.mean(g * g, axis=-1, keepdims=True)
        y_ref[0] = (g * jax.lax.rsqrt(ms + 1e-5) * nw_ref[d_idx]).astype(y_ref.dtype)

    finish(0, u_f, c_f, xzf_ref, hsf, yf_ref)
    finish(1, u_b, c_b, xzb_ref, hsb, yb_ref)


def mamba_bidir(xz, xe, params, alpha, chunk):
    B, L, Din2 = xz.shape
    Din = Din2 // 2
    N = params["d_state"]
    K = params["d_conv"]
    nc = L // chunk
    kern = functools.partial(_mamba_bidir_kernel, n_state=N, d_conv=K, alpha=alpha)

    def full(arr):
        nd = arr.ndim
        return pl.BlockSpec(arr.shape, lambda b, c, nd=nd: (0,) * nd)

    fwd = lambda b, c: (b, c, 0)
    bwd = lambda b, c: (b, nc - 1 - c, 0)
    p = params
    y_sds = jax.ShapeDtypeStruct((B, L, Din), jnp.bfloat16)
    return pl.pallas_call(
        kern,
        out_shape=(y_sds, y_sds),
        grid=(B, nc),
        in_specs=[pl.BlockSpec((1, chunk, 2 * Din), fwd),
                  pl.BlockSpec((1, chunk, 2 * Din), bwd),
                  pl.BlockSpec((1, chunk, Din), fwd),
                  pl.BlockSpec((1, chunk, Din), bwd),
                  full(p["conv_w"]), full(p["conv_b"]),
                  full(p["conv_e_w"]), full(p["conv_e_b"]),
                  full(p["w_fused"]), full(p["dt_b"]),
                  full(p["A_T"]), full(p["D"]), full(p["norm_w"])],
        out_specs=(pl.BlockSpec((1, chunk, Din), fwd),
                   pl.BlockSpec((1, chunk, Din), bwd)),
        scratch_shapes=[pltpu.VMEM((chunk, N, Din), jnp.float32),   # dA  (fwd)
                        pltpu.VMEM((chunk, N, Din), jnp.float32),   # dBu (fwd)
                        pltpu.VMEM((chunk, N, Din), jnp.float32),   # h history (fwd)
                        pltpu.VMEM((chunk, N, Din), jnp.float32),   # dA  (bwd)
                        pltpu.VMEM((chunk, N, Din), jnp.float32),   # dBu (bwd)
                        pltpu.VMEM((chunk, N, Din), jnp.float32),   # h history (bwd)
                        pltpu.VMEM((2, N, Din), jnp.float32),       # carried scan states
                        pltpu.VMEM((2, K - 1, Din), jnp.float32),   # conv halo (xm)
                        pltpu.VMEM((2, K - 1, Din), jnp.float32)],  # conv halo (xe)
        compiler_params=pltpu.CompilerParams(
            dimension_semantics=("parallel", "arbitrary"),
            vmem_limit_bytes=VMEM_LIMIT),
    )(xz, xz, xe, xe,
      p["conv_w"], p["conv_b"], p["conv_e_w"], p["conv_e_b"],
      p["w_fused"], p["dt_b"], p["A_T"], p["D"], p["norm_w"])


# ----------------------------------------------------------------------------
# Kernel 3: fused epilogue (out_proj folded into conv3d, skip path, divide-out)
#   outputs[i] = y_i @ (Wout@Wc) + skip @ Wc + b    (exact)
#   output     = 0.5 * (outputs[0] + outputs[1])    (exact)
#   y_f / y_b are row-stacked so one MXU matmul serves both directions.
# ----------------------------------------------------------------------------
def _epilogue_kernel(yf_ref, yb_ref, skip_ref, wf_ref, wc_ref, bc_ref,
                     out_ref, of_ref, ob_ref):
    tl = yf_ref.shape[1]
    y2 = jnp.concatenate([yf_ref[0], yb_ref[0]], axis=0)                 # (2*tl, Din) bf16
    o2 = jnp.dot(y2, wf_ref[...], preferred_element_type=jnp.float32)    # (2*tl, dim)
    sb = jnp.dot(skip_ref[0], wc_ref[...],
                 preferred_element_type=jnp.float32) + bc_ref[...]
    of = o2[:tl, :] + sb
    ob = o2[tl:, :] + sb
    of_ref[0] = of.astype(of_ref.dtype)
    ob_ref[0] = ob.astype(ob_ref.dtype)
    out_ref[0] = (0.5 * (of + ob)).astype(out_ref.dtype)


def fused_epilogue(y_f, y_b, skip, params, tl):
    B, L, Din = y_f.shape
    dim = params["dim"]
    nlt = L // tl
    y_spec = pl.BlockSpec((1, tl, Din), lambda i, j: (i, j, 0))
    s_spec = pl.BlockSpec((1, tl, dim), lambda i, j: (i, j, 0))
    o_spec = pl.BlockSpec((1, tl, dim), lambda i, j: (i, j, 0))
    out_sds = jax.ShapeDtypeStruct((B, L, dim), jnp.float32)
    return pl.pallas_call(
        _epilogue_kernel,
        out_shape=(out_sds, out_sds, out_sds),
        grid=(B, nlt),
        in_specs=[y_spec, y_spec, s_spec,
                  pl.BlockSpec((Din, dim), lambda i, j: (0, 0)),
                  pl.BlockSpec((dim, dim), lambda i, j: (0, 0)),
                  pl.BlockSpec((1, dim), lambda i, j: (0, 0))],
        out_specs=(o_spec, o_spec, o_spec),
        compiler_params=pltpu.CompilerParams(
            dimension_semantics=("parallel", "parallel"),
            vmem_limit_bytes=VMEM_LIMIT),
    )(y_f, y_b, skip, params["w_out_conv"], params["conv3d_w_bf"], params["conv3d_b"])


# ----------------------------------------------------------------------------
# Parameters (deterministic synthetic init; fused / stacked / bf16-prepped)
# ----------------------------------------------------------------------------
def init_params(dim, d_state=8, d_conv=4, key=None):
    Din = dim                                  # expand = 1
    N = d_state
    R = max(1, math.ceil(dim / 16))            # dt_rank
    ks = jax.random.split(key, 8)

    def nrm(k, shape, scale=0.1):
        return scale * jax.random.normal(k, shape, jnp.float32)

    def raw_dir(kd):
        kk = jax.random.split(kd, 6)
        A = jnp.tile(jnp.arange(1, N + 1, dtype=jnp.float32)[None, :], (Din, 1))
        return dict(
            conv_w=nrm(kk[0], (d_conv, Din)),
            conv_b=jnp.zeros((Din,), jnp.float32),
            conv_e_w=nrm(kk[1], (d_conv, Din)),
            conv_e_b=jnp.zeros((Din,), jnp.float32),
            x_proj_w=nrm(kk[2], (Din, R + 2 * N)),
            dt_proj_w=nrm(kk[3], (R, Din), scale=1.0),
            dt_proj_b=nrm(kk[4], (Din,), scale=0.5),
            A_T=-(A.T),                                   # (N, Din), negative
            D=jnp.ones((Din,), jnp.float32),
            norm_w=jnp.ones((Din,), jnp.float32),
        )

    fwd = raw_dir(ks[5])
    bwd = raw_dir(ks[6])

    def stack2(name, reshape=None):
        a0, a1 = fwd[name], bwd[name]
        if reshape is not None:
            a0, a1 = a0.reshape(reshape), a1.reshape(reshape)
        return jnp.stack([a0, a1], axis=0)

    def fuse_w(p):
        # columns ordered [dt | B | C]; dt_proj folded into x_proj (exact)
        dtw = p["x_proj_w"][:, :R] @ p["dt_proj_w"]            # (Din, Din)
        return jnp.concatenate([dtw, p["x_proj_w"][:, R:]], axis=1)   # (Din, Din + 2N)

    in_proj_w = nrm(ks[0], (dim, 2 * Din))
    in_proj_e_w = nrm(ks[1], (dim, Din))
    out_proj_w = nrm(ks[2], (Din, dim))
    conv3d_w = nrm(ks[3], (dim, dim))                     # 1x1x1 Conv3d == channel matmul
    conv3d_b = nrm(ks[4], (dim,), scale=0.05)

    return dict(
        dim=dim, d_state=N, d_conv=d_conv, dt_rank=R,
        norm0_g=jnp.ones((dim,), jnp.float32), norm0_b=jnp.zeros((dim,), jnp.float32),
        norm1_g=jnp.ones((dim,), jnp.float32), norm1_b=jnp.zeros((dim,), jnp.float32),
        in_proj_w=in_proj_w.astype(jnp.bfloat16),                       # (C, 2*Din)
        in_proj_e_w=in_proj_e_w.astype(jnp.bfloat16),                   # (C, Din)
        conv_w=stack2("conv_w"),                                        # (2, K, Din)
        conv_b=stack2("conv_b", (1, Din)),                              # (2, 1, Din)
        conv_e_w=stack2("conv_e_w"),
        conv_e_b=stack2("conv_e_b", (1, Din)),
        w_fused=jnp.stack([fuse_w(fwd), fuse_w(bwd)], 0).astype(jnp.bfloat16),  # (2,Din,Din+2N)
        dt_b=stack2("dt_proj_b", (1, Din)),                             # (2, 1, Din)
        A_T=stack2("A_T"),                                              # (2, N, Din)
        D=stack2("D", (1, Din)),
        norm_w=stack2("norm_w", (1, Din)),
        w_out_conv=(out_proj_w @ conv3d_w).astype(jnp.bfloat16),        # (Din, dim)
        conv3d_w_bf=conv3d_w.astype(jnp.bfloat16),
        conv3d_b=conv3d_b.reshape(1, dim),
    )


# ----------------------------------------------------------------------------
# Forward pass
# ----------------------------------------------------------------------------
def match_mamba_block(params, input0, input1, alpha=None):
    b, c, h, w, d = input0.shape
    L = h * w * d
    a = 1.0 if alpha is None else float(alpha)

    def to_seq(x):    # 'b c h w d -> b (h w d) c'
        return jnp.transpose(x, (0, 2, 3, 4, 1)).reshape(b, L, c)

    def from_seq(x):  # 'b (h w d) c -> b c h w d'
        return jnp.transpose(x.reshape(b, h, w, d, c), (0, 4, 1, 2, 3))

    x0 = to_seq(input0)          # also the skip path
    x1 = to_seq(input1)

    tl = _pick_tile(L)
    xz, xe = fused_norm_inproj(x0, x1, params, tl)

    chunk = _pick_chunk(L, params["d_state"], params["dim"])
    y_f, y_b = mamba_bidir(xz, xe, params, a, chunk)

    skip_bf = x0.astype(jnp.bfloat16)   # kernel would cast anyway; halve its HBM read
    out, out_f, out_b = fused_epilogue(y_f, y_b, skip_bf, params, tl)
    return from_seq(out), [from_seq(out_f), from_seq(out_b)]


# ----------------------------------------------------------------------------
# Main
# ----------------------------------------------------------------------------
if __name__ == "__main__":
    B, C, H, W, D = 2, 16, 4, 4, 4
    key = jax.random.PRNGKey(0)
    k0, k1 = jax.random.split(key)
    input0 = jax.random.normal(k0, (B, C, H, W, D), jnp.float32)
    input1 = jax.random.normal(k1, (B, C, H, W, D), jnp.float32)

    params = init_params(C, d_state=8, d_conv=4, key=jax.random.PRNGKey(1))

    output, outputs = match_mamba_block(params, input0, input1, alpha=None)
    output = jax.block_until_ready(output)
    outputs = [jax.block_until_ready(o) for o in outputs]

    assert output.shape == (B, C, H, W, D)
    assert all(o.shape == (B, C, H, W, D) for o in outputs)
    assert bool(jnp.all(jnp.isfinite(output)))
    assert all(bool(jnp.all(jnp.isfinite(o))) for o in outputs)
    print("KERNEL_OK")
</pallas_src>

<mosaic_0001>
module attributes {stable_mosaic.version = 11 : i64} {
  func.func @_pre_kernel(%arg0: i32, %arg1: i32, %arg2: memref<1x64x16xf32, #tpu.memory_space<vmem>>, %arg3: memref<1x64x16xf32, #tpu.memory_space<vmem>>, %arg4: memref<1x16xf32, #tpu.memory_space<vmem>>, %arg5: memref<1x16xf32, #tpu.memory_space<vmem>>, %arg6: memref<1x16xf32, #tpu.memory_space<vmem>>, %arg7: memref<1x16xf32, #tpu.memory_space<vmem>>, %arg8: memref<16x32xbf16, #tpu.memory_space<vmem>>, %arg9: memref<16x16xbf16, #tpu.memory_space<vmem>>, %arg10: memref<1x64x32xbf16, #tpu.memory_space<vmem>>, %arg11: memref<1x64x16xbf16, #tpu.memory_space<vmem>>) attributes {dimension_semantics = [#tpu.dimension_semantics<parallel>, #tpu.dimension_semantics<parallel>], iteration_bounds = array<i64: 2, 1>, scalar_prefetch = 0 : i64, scratch_operands = 0 : i64, tpu.core_type = #tpu.core_type<tc>, window_params = [{transform_indices = @transform_0, window_bounds = array<i64: 1, 64, 16>}, {transform_indices = @transform_1, window_bounds = array<i64: 1, 64, 16>}, {pipeline_mode = #tpu.pipeline_mode<synchronous>, transform_indices = @transform_2, window_bounds = array<i64: 1, 16>}, {pipeline_mode = #tpu.pipeline_mode<synchronous>, transform_indices = @transform_3, window_bounds = array<i64: 1, 16>}, {pipeline_mode = #tpu.pipeline_mode<synchronous>, transform_indices = @transform_4, window_bounds = array<i64: 1, 16>}, {pipeline_mode = #tpu.pipeline_mode<synchronous>, transform_indices = @transform_5, window_bounds = array<i64: 1, 16>}, {pipeline_mode = #tpu.pipeline_mode<synchronous>, transform_indices = @transform_6, window_bounds = array<i64: 16, 32>}, {pipeline_mode = #tpu.pipeline_mode<synchronous>, transform_indices = @transform_7, window_bounds = array<i64: 16, 16>}, {transform_indices = @transform_8, window_bounds = array<i64: 1, 64, 32>}, {transform_indices = @transform_9, window_bounds = array<i64: 1, 64, 16>}]} {
    %c0 = arith.constant 0 : index
    %c0_0 = arith.constant 0 : index
    %c0_1 = arith.constant 0 : index
    %0 = vector.load %arg2[%c0, %c0_0, %c0_1] : memref<1x64x16xf32, #tpu.memory_space<vmem>>, vector<1x64x16xf32>
    %1 = vector.shape_cast %0 : vector<1x64x16xf32> to vector<64x16xf32>
    %cst = arith.constant dense<0.000000e+00> : vector<64xf32>
    %2 = vector.multi_reduction <add>, %1, %cst [1] : vector<64x16xf32> to vector<64xf32>
    %3 = vector.shape_cast %2 : vector<64xf32> to vector<64x1xf32>
    %cst_2 = arith.constant 1.600000e+01 : f32
    %4 = vector.broadcast %cst_2 : f32 to vector<64x1xf32>
    %5 = arith.divf %3, %4 : vector<64x1xf32>
    %6 = vector.broadcast %5 : vector<64x1xf32> to vector<64x16xf32>
    %7 = arith.subf %1, %6 : vector<64x16xf32>
    %8 = arith.mulf %7, %7 : vector<64x16xf32>
    %cst_3 = arith.constant dense<0.000000e+00> : vector<64xf32>
    %9 = vector.multi_reduction <add>, %8, %cst_3 [1] : vector<64x16xf32> to vector<64xf32>
    %10 = vector.shape_cast %9 : vector<64xf32> to vector<64x1xf32>
    %cst_4 = arith.constant 1.600000e+01 : f32
    %11 = vector.broadcast %cst_4 : f32 to vector<64x1xf32>
    %12 = arith.divf %10, %11 : vector<64x1xf32>
    %cst_5 = arith.constant 9.99999974E-6 : f32
    %13 = vector.broadcast %cst_5 : f32 to vector<64x1xf32>
    %14 = arith.addf %12, %13 : vector<64x1xf32>
    %15 = math.rsqrt %14 : vector<64x1xf32>
    %16 = vector.broadcast %15 : vector<64x1xf32> to vector<64x16xf32>
    %17 = arith.mulf %7, %16 : vector<64x16xf32>
    %c0_6 = arith.constant 0 : index
    %c0_7 = arith.constant 0 : index
    %18 = vector.load %arg4[%c0_6, %c0_7] : memref<1x16xf32, #tpu.memory_space<vmem>>, vector<1x16xf32>
    %19 = vector.broadcast %18 : vector<1x16xf32> to vector<64x16xf32>
    %20 = arith.mulf %17, %19 : vector<64x16xf32>
    %c0_8 = arith.constant 0 : index
    %c0_9 = arith.constant 0 : index
    %21 = vector.load %arg5[%c0_8, %c0_9] : memref<1x16xf32, #tpu.memory_space<vmem>>, vector<1x16xf32>
    %22 = vector.broadcast %21 : vector<1x16xf32> to vector<64x16xf32>
    %23 = arith.addf %20, %22 : vector<64x16xf32>
    %24 = arith.truncf %23 : vector<64x16xf32> to vector<64x16xbf16>
    %c0_10 = arith.constant 0 : index
    %c0_11 = arith.constant 0 : index
    %c0_12 = arith.constant 0 : index
    %25 = vector.load %arg3[%c0_10, %c0_11, %c0_12] : memref<1x64x16xf32, #tpu.memory_space<vmem>>, vector<1x64x16xf32>
    %26 = vector.shape_cast %25 : vector<1x64x16xf32> to vector<64x16xf32>
    %cst_13 = arith.constant dense<0.000000e+00> : vector<64xf32>
    %27 = vector.multi_reduction <add>, %26, %cst_13 [1] : vector<64x16xf32> to vector<64xf32>
    %28 = vector.shape_cast %27 : vector<64xf32> to vector<64x1xf32>
    %cst_14 = arith.constant 1.600000e+01 : f32
    %29 = vector.broadcast %cst_14 : f32 to vector<64x1xf32>
    %30 = arith.divf %28, %29 : vector<64x1xf32>
    %31 = vector.broadcast %30 : vector<64x1xf32> to vector<64x16xf32>
    %32 = arith.subf %26, %31 : vector<64x16xf32>
    %33 = arith.mulf %32, %32 : vector<64x16xf32>
    %cst_15 = arith.constant dense<0.000000e+00> : vector<64xf32>
    %34 = vector.multi_reduction <add>, %33, %cst_15 [1] : vector<64x16xf32> to vector<64xf32>
    %35 = vector.shape_cast %34 : vector<64xf32> to vector<64x1xf32>
    %cst_16 = arith.constant 1.600000e+01 : f32
    %36 = vector.broadcast %cst_16 : f32 to vector<64x1xf32>
    %37 = arith.divf %35, %36 : vector<64x1xf32>
    %cst_17 = arith.constant 9.99999974E-6 : f32
    %38 = vector.broadcast %cst_17 : f32 to vector<64x1xf32>
    %39 = arith.addf %37, %38 : vector<64x1xf32>
    %40 = math.rsqrt %39 : vector<64x1xf32>
    %41 = vector.broadcast %40 : vector<64x1xf32> to vector<64x16xf32>
    %42 = arith.mulf %32, %41 : vector<64x16xf32>
    %c0_18 = arith.constant 0 : index
    %c0_19 = arith.constant 0 : index
    %43 = vector.load %arg6[%c0_18, %c0_19] : memref<1x16xf32, #tpu.memory_space<vmem>>, vector<1x16xf32>
    %44 = vector.broadcast %43 : vector<1x16xf32> to vector<64x16xf32>
    %45 = arith.mulf %42, %44 : vector<64x16xf32>
    %c0_20 = arith.constant 0 : index
    %c0_21 = arith.constant 0 : index
    %46 = vector.load %arg7[%c0_20, %c0_21] : memref<1x16xf32, #tpu.memory_space<vmem>>, vector<1x16xf32>
    %47 = vector.broadcast %46 : vector<1x16xf32> to vector<64x16xf32>
    %48 = arith.addf %45, %47 : vector<64x16xf32>
    %49 = arith.truncf %48 : vector<64x16xf32> to vector<64x16xbf16>
    %c0_22 = arith.constant 0 : index
    %c0_23 = arith.constant 0 : index
    %50 = vector.load %arg8[%c0_22, %c0_23] : memref<16x32xbf16, #tpu.memory_space<vmem>>, vector<16x32xbf16>
    %cst_24 = arith.constant dense<0.000000e+00> : vector<64x32xf32>
    %51 = tpu.matmul %24, %50, %cst_24 {dimension_numbers = #tpu.dot_dimension_numbers<[1], [0], [0], [1], [0, 0, 1, 1], [], []>} : vector<64x16xbf16>, vector<16x32xbf16>, vector<64x32xf32> -> vector<64x32xf32>
    %52 = arith.truncf %51 : vector<64x32xf32> to vector<64x32xbf16>
    %c0_25 = arith.constant 0 : index
    %c0_26 = arith.constant 0 : index
    %c0_27 = arith.constant 0 : index
    %53 = vector.load %arg10[%c0_25, %c0_26, %c0_27] : memref<1x64x32xbf16, #tpu.memory_space<vmem>>, vector<1x64x32xbf16>
    %54 = vector.shape_cast %53 : vector<1x64x32xbf16> to vector<64x32xbf16>
    %55 = vector.shape_cast %52 : vector<64x32xbf16> to vector<1x64x32xbf16>
    tpu.vector_store %arg10[%c0_25, %c0_26, %c0_27], %55 {strides = array<i32>} : memref<1x64x32xbf16, #tpu.memory_space<vmem>>, vector<1x64x32xbf16>,
    %c0_28 = arith.constant 0 : index
    %c0_29 = arith.constant 0 : index
    %56 = vector.load %arg9[%c0_28, %c0_29] : memref<16x16xbf16, #tpu.memory_space<vmem>>, vector<16x16xbf16>
    %cst_30 = arith.constant dense<0.000000e+00> : vector<64x16xf32>
    %57 = tpu.matmul %49, %56, %cst_30 {dimension_numbers = #tpu.dot_dimension_numbers<[1], [0], [0], [1], [0, 0, 1, 1], [], []>} : vector<64x16xbf16>, vector<16x16xbf16>, vector<64x16xf32> -> vector<64x16xf32>
    %58 = arith.truncf %57 : vector<64x16xf32> to vector<64x16xbf16>
    %c0_31 = arith.constant 0 : index
    %c0_32 = arith.constant 0 : index
    %c0_33 = arith.constant 0 : index
    %59 = vector.load %arg11[%c0_31, %c0_32, %c0_33] : memref<1x64x16xbf16, #tpu.memory_space<vmem>>, vector<1x64x16xbf16>
    %60 = vector.shape_cast %59 : vector<1x64x16xbf16> to vector<64x16xbf16>
    %61 = vector.shape_cast %58 : vector<64x16xbf16> to vector<1x64x16xbf16>
    tpu.vector_store %arg11[%c0_31, %c0_32, %c0_33], %61 {strides = array<i32>} : memref<1x64x16xbf16, #tpu.memory_space<vmem>>, vector<1x64x16xbf16>,
    return
  }
  func.func @transform_0(%arg0: i32, %arg1: i32) -> (i32, i32, i32) {
    %c0_i32 = arith.constant 0 : i32
    %c0_i32_0 = arith.constant 0 : i32
    return %arg0, %arg1, %c0_i32 : i32, i32, i32
  }
  func.func @transform_1(%arg0: i32, %arg1: i32) -> (i32, i32, i32) {
    %c0_i32 = arith.constant 0 : i32
    %c0_i32_0 = arith.constant 0 : i32
    return %arg0, %arg1, %c0_i32 : i32, i32, i32
  }
  func.func @transform_2(%arg0: i32, %arg1: i32) -> (i32, i32) {
    %c0_i32 = arith.constant 0 : i32
    %c0_i32_0 = arith.constant 0 : i32
    %c0_i32_1 = arith.constant 0 : i32
    return %c0_i32, %c0_i32_0 : i32, i32
  }
  func.func @transform_3(%arg0: i32, %arg1: i32) -> (i32, i32) {
    %c0_i32 = arith.constant 0 : i32
    %c0_i32_0 = arith.constant 0 : i32
    %c0_i32_1 = arith.constant 0 : i32
    return %c0_i32, %c0_i32_0 : i32, i32
  }
  func.func @transform_4(%arg0: i32, %arg1: i32) -> (i32, i32) {
    %c0_i32 = arith.constant 0 : i32
    %c0_i32_0 = arith.constant 0 : i32
    %c0_i32_1 = arith.constant 0 : i32
    return %c0_i32, %c0_i32_0 : i32, i32
  }
  func.func @transform_5(%arg0: i32, %arg1: i32) -> (i32, i32) {
    %c0_i32 = arith.constant 0 : i32
    %c0_i32_0 = arith.constant 0 : i32
    %c0_i32_1 = arith.constant 0 : i32
    return %c0_i32, %c0_i32_0 : i32, i32
  }
  func.func @transform_6(%arg0: i32, %arg1: i32) -> (i32, i32) {
    %c0_i32 = arith.constant 0 : i32
    %c0_i32_0 = arith.constant 0 : i32
    %c0_i32_1 = arith.constant 0 : i32
    return %c0_i32, %c0_i32_0 : i32, i32
  }
  func.func @transform_7(%arg0: i32, %arg1: i32) -> (i32, i32) {
    %c0_i32 = arith.constant 0 : i32
    %c0_i32_0 = arith.constant 0 : i32
    %c0_i32_1 = arith.constant 0 : i32
    return %c0_i32, %c0_i32_0 : i32, i32
  }
  func.func @transform_8(%arg0: i32, %arg1: i32) -> (i32, i32, i32) {
    %c0_i32 = arith.constant 0 : i32
    %c0_i32_0 = arith.constant 0 : i32
    return %arg0, %arg1, %c0_i32 : i32, i32, i32
  }
  func.func @transform_9(%arg0: i32, %arg1: i32) -> (i32, i32, i32) {
    %c0_i32 = arith.constant 0 : i32
    %c0_i32_0 = arith.constant 0 : i32
    return %arg0, %arg1, %c0_i32 : i32, i32, i32
  }
}

</mosaic_0001>

<llo_original>
// kernel: tpu_custom_call.1
$region0: #{tpu_custom_call.1}
  #allocation0 [shape = 'u32[]', space=smem, size = 0x4, offset = 0x4, fixed_abs, tag = 'smem constant byte address 0x4 - core index']
  #allocation1 [shape = 'u32[144,128]{1,0:T(1,128)}', space=vmem, size = 0x12000, scoped, tag = 'internal scratch']
  %s0 = inlined_call_operand.vmem [shape: f32[2,64,16], index: 0, kind: input, shape index: {}]
  %s1 = inlined_call_operand.vmem [shape: f32[2,64,16], index: 1, kind: input, shape index: {}]
  %s2 = inlined_call_operand.vmem [shape: f32[1,16], index: 2, kind: input, shape index: {}]
  %s3 = inlined_call_operand.vmem [shape: f32[1,16], index: 3, kind: input, shape index: {}]
  %s4 = inlined_call_operand.vmem [shape: f32[1,16], index: 4, kind: input, shape index: {}]
  %s5 = inlined_call_operand.vmem [shape: f32[1,16], index: 5, kind: input, shape index: {}]
  %s6 = inlined_call_operand.vmem [shape: bf16[16,32], index: 6, kind: input, shape index: {}]
  %s7 = inlined_call_operand.vmem [shape: bf16[16,16], index: 7, kind: input, shape index: {}]
  %s8 = inlined_call_operand.vmem [shape: bf16[2,64,32], index: 8, kind: output, shape index: {0}]
  %s9 = inlined_call_operand.vmem [shape: bf16[2,64,16], index: 9, kind: output, shape index: {1}]
  %10 = xla_tuple %s8, %s9
  %s11 = sld [smem:[#allocation0]]
  $region73: #{tpu_custom_call.1} parent=0
    _
  %s13 = ssub.s32 1, %s11
  %s14 = scalar_select 0, %s13, %s11
  loop: start=0, step=1, limit=4
  $region2: #{tpu_custom_call.1} parent=0 // loop_pre_header
    _
  $region3: #{tpu_custom_call.1} parent=0 // loop_header
    %s16 = sphi 0, %s20
    %p17 = scmp.ge.s32.totalorder %s16, 4
    %s23 = sphi 0, %s35
    %s24 = sphi 0, %s31
    %s25 = sphi 0, %s23
    %s26 = sphi 0, %s24
    %s27 = sphi 0, %s25
    %s28 = sphi 0, %s26
    %s40 = sphi 0, %s42
    %s43 = sphi 0, %s40
    %s44 = sphi 0, %s43
    %s60 = sphi 0, %s44
    %s68 = sphi 0, %s70
    %s71 = sphi 0, %s68
    %s72 = sphi 0, %s71
    %s88 = sphi 0, %s72
    %s92 = sphi 0, %s92
    %s94 = sphi 0, %s92
    %s95 = sphi 0, %s94
    %s109 = sphi 0, %s95
    %s113 = sphi 0, %s113
    %s115 = sphi 0, %s113
    %s116 = sphi 0, %s115
    %s130 = sphi 0, %s116
    %s134 = sphi 0, %s134
    %s136 = sphi 0, %s134
    %s137 = sphi 0, %s136
    %s151 = sphi 0, %s137
    %s155 = sphi 0, %s155
    %s157 = sphi 0, %s155
    %s158 = sphi 0, %s157
    %s172 = sphi 0, %s158
    %s176 = sphi 0, %s176
    %s178 = sphi 0, %s176
    %s179 = sphi 0, %s178
    %s193 = sphi 0, %s179
    %s197 = sphi 0, %s197
    %s199 = sphi 0, %s197
    %s200 = sphi 0, %s199
    %s214 = sphi 0, %s200
    %s222 = sphi 0, %s224
    %s225 = sphi 0, %s222
    %s226 = sphi 0, %s225
    %s242 = sphi 0, %s226
    %s250 = sphi 0, %s252
    %s253 = sphi 0, %s250
    %s254 = sphi 0, %s253
    %s270 = sphi 0, %s254
  $region4: #{tpu_custom_call.1} parent=0 // loop_header_branch
    %19 = sbr.rel (%p17) target = $region8
  $region5: #{tpu_custom_call.1} parent=0 // loop_body
    %s21 = ssub.s32 %s16, 1
    %s22 = ssub.s32 %s16, 2
    %s29 = sadd.s32 1, %s24
    %p30 = scmp.ge.s32.totalorder %s29, 1
    %s31 = scalar_select %p30, 0, %s29
    %s32 = sadd.s32 1, %s23
    %s33 = scalar_select %p30, %s32, %s23
    %p34 = scmp.ge.s32.totalorder %s33, 2
    %s35 = scalar_select %p34, 0, %s33
    %s36 = ssub.s32 %s23, %s35
    %s37 = ssub.s32 %s24, %s31
    %s38 = sor.u32 %s36, %s37
    %p39 = scmp.eq.s32.totalorder %s38, 0
    %s41 = sadd.s32 %s40, 1
    %s42 = scalar_select %p39, %s40, %s41
    %p45 = pneg %p39
    %p46 = scmp.eq.s32.totalorder %s16, 1
    %p47 = por %p45, %p46
    %p48 = scmp.ne.s32.totalorder %s40, %s43
    %p49 = scmp.eq.s32.totalorder %s16, 0
    %p50 = por %p48, %p49
    %p51 = scmp.ne.s32.totalorder %s40, %s43
    %p52 = scmp.eq.s32.totalorder %s21, 1
    %p53 = por %p51, %p52
    %p54 = scmp.ne.s32.totalorder %s43, %s44
    %p55 = scmp.eq.s32.totalorder %s21, 0
    %p56 = por %p54, %p55
    %p57 = scmp.ne.s32.totalorder %s43, %s44
    %p58 = scmp.eq.s32.totalorder %s22, 1
    %p59 = por %p57, %p58
    %p61 = scmp.ne.s32.totalorder %s44, %s60
    %p62 = scmp.eq.s32.totalorder %s22, 0
    %p63 = por %p61, %p62
    %s64 = ssub.s32 %s23, %s35
    %s65 = ssub.s32 %s24, %s31
    %s66 = sor.u32 %s64, %s65
    %p67 = scmp.eq.s32.totalorder %s66, 0
    %s69 = sadd.s32 %s68, 1
    %s70 = scalar_select %p67, %s68, %s69
    %p73 = pneg %p67
    %p74 = scmp.eq.s32.totalorder %s16, 1
    %p75 = por %p73, %p74
    %p76 = scmp.ne.s32.totalorder %s68, %s71
    %p77 = scmp.eq.s32.totalorder %s16, 0
    %p78 = por %p76, %p77
    %p79 = scmp.ne.s32.totalorder %s68, %s71
    %p80 = scmp.eq.s32.totalorder %s21, 1
    %p81 = por %p79, %p80
    %p82 = scmp.ne.s32.totalorder %s71, %s72
    %p83 = scmp.eq.s32.totalorder %s21, 0
    %p84 = por %p82, %p83
    %p85 = scmp.ne.s32.totalorder %s71, %s72
    %p86 = scmp.eq.s32.totalorder %s22, 1
    %p87 = por %p85, %p86
    %p89 = scmp.ne.s32.totalorder %s72, %s88
    %p90 = scmp.eq.s32.totalorder %s22, 0
    %p91 = por %p89, %p90
    %s93 = sadd.s32 %s92, 1
    %p96 = scmp.eq.s32.totalorder %s16, 1
    %p97 = scmp.ne.s32.totalorder %s92, %s94
    %p98 = scmp.eq.s32.totalorder %s16, 0
    %p99 = por %p97, %p98
    %p100 = scmp.ne.s32.totalorder %s92, %s94
    %p101 = scmp.eq.s32.totalorder %s21, 1
    %p102 = por %p100, %p101
    %p103 = scmp.ne.s32.totalorder %s94, %s95
    %p104 = scmp.eq.s32.totalorder %s21, 0
    %p105 = por %p103, %p104
    %p106 = scmp.ne.s32.totalorder %s94, %s95
    %p107 = scmp.eq.s32.totalorder %s22, 1
    %p108 = por %p106, %p107
    %p110 = scmp.ne.s32.totalorder %s95, %s109
    %p111 = scmp.eq.s32.totalorder %s22, 0
    %p112 = por %p110, %p111
    %s114 = sadd.s32 %s113, 1
    %p117 = scmp.eq.s32.totalorder %s16, 1
    %p118 = scmp.ne.s32.totalorder %s113, %s115
    %p119 = scmp.eq.s32.totalorder %s16, 0
    %p120 = por %p118, %p119
    %p121 = scmp.ne.s32.totalorder %s113, %s115
    %p122 = scmp.eq.s32.totalorder %s21, 1
    %p123 = por %p121, %p122
    %p124 = scmp.ne.s32.totalorder %s115, %s116
    %p125 = scmp.eq.s32.totalorder %s21, 0
    %p126 = por %p124, %p125
    %p127 = scmp.ne.s32.totalorder %s115, %s116
    %p128 = scmp.eq.s32.totalorder %s22, 1
    %p129 = por %p127, %p128
    %p131 = scmp.ne.s32.totalorder %s116, %s130
    %p132 = scmp.eq.s32.totalorder %s22, 0
    %p133 = por %p131, %p132
    %s135 = sadd.s32 %s134, 1
    %p138 = scmp.eq.s32.totalorder %s16, 1
    %p139 = scmp.ne.s32.totalorder %s134, %s136
    %p140 = scmp.eq.s32.totalorder %s16, 0
    %p141 = por %p139, %p140
    %p142 = scmp.ne.s32.totalorder %s134, %s136
    %p143 = scmp.eq.s32.totalorder %s21, 1
    %p144 = por %p142, %p143
    %p145 = scmp.ne.s32.totalorder %s136, %s137
    %p146 = scmp.eq.s32.totalorder %s21, 0
    %p147 = por %p145, %p146
    %p148 = scmp.ne.s32.totalorder %s136, %s137
    %p149 = scmp.eq.s32.totalorder %s22, 1
    %p150 = por %p148, %p149
    %p152 = scmp.ne.s32.totalorder %s137, %s151
    %p153 = scmp.eq.s32.totalorder %s22, 0
    %p154 = por %p152, %p153
    %s156 = sadd.s32 %s155, 1
    %p159 = scmp.eq.s32.totalorder %s16, 1
    %p160 = scmp.ne.s32.totalorder %s155, %s157
    %p161 = scmp.eq.s32.totalorder %s16, 0
    %p162 = por %p160, %p161
    %p163 = scmp.ne.s32.totalorder %s155, %s157
    %p164 = scmp.eq.s32.totalorder %s21, 1
    %p165 = por %p163, %p164
    %p166 = scmp.ne.s32.totalorder %s157, %s158
    %p167 = scmp.eq.s32.totalorder %s21, 0
    %p168 = por %p166, %p167
    %p169 = scmp.ne.s32.totalorder %s157, %s158
    %p170 = scmp.eq.s32.totalorder %s22, 1
    %p171 = por %p169, %p170
    %p173 = scmp.ne.s32.totalorder %s158, %s172
    %p174 = scmp.eq.s32.totalorder %s22, 0
    %p175 = por %p173, %p174
    %s177 = sadd.s32 %s176, 1
    %p180 = scmp.eq.s32.totalorder %s16, 1
    %p181 = scmp.ne.s32.totalorder %s176, %s178
    %p182 = scmp.eq.s32.totalorder %s16, 0
    %p183 = por %p181, %p182
    %p184 = scmp.ne.s32.totalorder %s176, %s178
    %p185 = scmp.eq.s32.totalorder %s21, 1
    %p186 = por %p184, %p185
    %p187 = scmp.ne.s32.totalorder %s178, %s179
    %p188 = scmp.eq.s32.totalorder %s21, 0
    %p189 = por %p187, %p188
    %p190 = scmp.ne.s32.totalorder %s178, %s179
    %p191 = scmp.eq.s32.totalorder %s22, 1
    %p192 = por %p190, %p191
    %p194 = scmp.ne.s32.totalorder %s179, %s193
    %p195 = scmp.eq.s32.totalorder %s22, 0
    %p196 = por %p194, %p195
    %s198 = sadd.s32 %s197, 1
    %p201 = scmp.eq.s32.totalorder %s16, 1
    %p202 = scmp.ne.s32.totalorder %s197, %s199
    %p203 = scmp.eq.s32.totalorder %s16, 0
    %p204 = por %p202, %p203
    %p205 = scmp.ne.s32.totalorder %s197, %s199
    %p206 = scmp.eq.s32.totalorder %s21, 1
    %p207 = por %p205, %p206
    %p208 = scmp.ne.s32.totalorder %s199, %s200
    %p209 = scmp.eq.s32.totalorder %s21, 0
    %p210 = por %p208, %p209
    %p211 = scmp.ne.s32.totalorder %s199, %s200
    %p212 = scmp.eq.s32.totalorder %s22, 1
    %p213 = por %p211, %p212
    %p215 = scmp.ne.s32.totalorder %s200, %s214
    %p216 = scmp.eq.s32.totalorder %s22, 0
    %p217 = por %p215, %p216
    %s218 = ssub.s32 %s23, %s35
    %s219 = ssub.s32 %s24, %s31
    %s220 = sor.u32 %s218, %s219
    %p221 = scmp.eq.s32.totalorder %s220, 0
    %s223 = sadd.s32 %s222, 1
    %s224 = scalar_select %p221, %s222, %s223
    %p227 = pneg %p221
    %p228 = scmp.eq.s32.totalorder %s16, 1
    %p229 = por %p227, %p228
    %p230 = scmp.ne.s32.totalorder %s222, %s225
    %p231 = scmp.eq.s32.totalorder %s16, 0
    %p232 = por %p230, %p231
    %p233 = scmp.ne.s32.totalorder %s222, %s225
    %p234 = scmp.eq.s32.totalorder %s21, 1
    %p235 = por %p233, %p234
    %p236 = scmp.ne.s32.totalorder %s225, %s226
    %p237 = scmp.eq.s32.totalorder %s21, 0
    %p238 = por %p236, %p237
    %p239 = scmp.ne.s32.totalorder %s225, %s226
    %p240 = scmp.eq.s32.totalorder %s22, 1
    %p241 = por %p239, %p240
    %p243 = scmp.ne.s32.totalorder %s226, %s242
    %p244 = scmp.eq.s32.totalorder %s22, 0
    %p245 = por %p243, %p244
    %s246 = ssub.s32 %s23, %s35
    %s247 = ssub.s32 %s24, %s31
    %s248 = sor.u32 %s246, %s247
    %p249 = scmp.eq.s32.totalorder %s248, 0
    %s251 = sadd.s32 %s250, 1
    %s252 = scalar_select %p249, %s250, %s251
    %p255 = pneg %p249
    %p256 = scmp.eq.s32.totalorder %s16, 1
    %p257 = por %p255, %p256
    %p258 = scmp.ne.s32.totalorder %s250, %s253
    %p259 = scmp.eq.s32.totalorder %s16, 0
    %p260 = por %p258, %p259
    %p261 = scmp.ne.s32.totalorder %s250, %s253
    %p262 = scmp.eq.s32.totalorder %s21, 1
    %p263 = por %p261, %p262
    %p264 = scmp.ne.s32.totalorder %s253, %s254
    %p265 = scmp.eq.s32.totalorder %s21, 0
    %p266 = por %p264, %p265
    %p267 = scmp.ne.s32.totalorder %s253, %s254
    %p268 = scmp.eq.s32.totalorder %s22, 1
    %p269 = por %p267, %p268
    %p271 = scmp.ne.s32.totalorder %s254, %s270
    %p272 = scmp.eq.s32.totalorder %s22, 0
    %p273 = por %p271, %p272
    %p274 = scmp.le.s32.totalorder 1, %s16
    %p275 = scmp.lt.s32.totalorder %s16, 3
    %p276 = pnand %p274, %p275
    %p277 = pneg %p276
    // Predicated region
    $region9: #{tpu_custom_call.1} parent=5 // pred_check
      _
    $region10: #{tpu_custom_call.1} parent=5 // pred_check_branch
      %279 = sbr.rel (%p276) target = $region12
    $region11: #{tpu_custom_call.1} parent=5 // pred_region
      %s280 = ssub.s32 %s16, 1
      // Predicated region
      $region13: #{tpu_custom_call.1} parent=11 // pred_check
        %p281 = pneg %p105
      $region14: #{tpu_custom_call.1} parent=11 // pred_check_branch
        %283 = sbr.rel (%p281) target = $region16
      $region15: #{tpu_custom_call.1} parent=11 // pred_region
        _
      $region16: #{tpu_custom_call.1} parent=11 // pred_fallthru
        _
      // Predicated region
      $region17: #{tpu_custom_call.1} parent=11 // pred_check
        %p284 = pneg %p126
      $region18: #{tpu_custom_call.1} parent=11 // pred_check_branch
        %286 = sbr.rel (%p284) target = $region20
      $region19: #{tpu_custom_call.1} parent=11 // pred_region
        _
      $region20: #{tpu_custom_call.1} parent=11 // pred_fallthru
        _
      // Predicated region
      $region21: #{tpu_custom_call.1} parent=11 // pred_check
        %p287 = pneg %p147
      $region22: #{tpu_custom_call.1} parent=11 // pred_check_branch
        %289 = sbr.rel (%p287) target = $region24
      $region23: #{tpu_custom_call.1} parent=11 // pred_region
        _
      $region24: #{tpu_custom_call.1} parent=11 // pred_fallthru
        _
      // Predicated region
      $region25: #{tpu_custom_call.1} parent=11 // pred_check
        %p290 = pneg %p168
      $region26: #{tpu_custom_call.1} parent=11 // pred_check_branch
        %292 = sbr.rel (%p290) target = $region28
      $region27: #{tpu_custom_call.1} parent=11 // pred_region
        _
      $region28: #{tpu_custom_call.1} parent=11 // pred_fallthru
        _
      // Predicated region
      $region29: #{tpu_custom_call.1} parent=11 // pred_check
        %p293 = pneg %p189
      $region30: #{tpu_custom_call.1} parent=11 // pred_check_branch
        %295 = sbr.rel (%p293) target = $region32
      $region31: #{tpu_custom_call.1} parent=11 // pred_region
        _
      $region32: #{tpu_custom_call.1} parent=11 // pred_fallthru
        _
      // Predicated region
      $region33: #{tpu_custom_call.1} parent=11 // pred_check
        %p296 = pneg %p210
      $region34: #{tpu_custom_call.1} parent=11 // pred_check_branch
        %298 = sbr.rel (%p296) target = $region36
      $region35: #{tpu_custom_call.1} parent=11 // pred_region
        _
      $region36: #{tpu_custom_call.1} parent=11 // pred_fallthru
        _
    $region12: #{tpu_custom_call.1} parent=5 // pred_fallthru
      _
    %p299 = scmp.lt.s32.totalorder %s16, 2
    // Predicated region
    $region37: #{tpu_custom_call.1} parent=5 // pred_check
      %p300 = pneg %p299
    $region38: #{tpu_custom_call.1} parent=5 // pred_check_branch
      %302 = sbr.rel (%p300) target = $region40
    $region39: #{tpu_custom_call.1} parent=5 // pred_region
      // Predicated region
      $region41: #{tpu_custom_call.1} parent=39 // pred_check
        %p303 = pneg %p50
      $region42: #{tpu_custom_call.1} parent=39 // pred_check_branch
        %305 = sbr.rel (%p303) target = $region44
      $region43: #{tpu_custom_call.1} parent=39 // pred_region
        %s306 = smul.u32 8, %s24
        %p307 = scmp.lt.s32.totalorder %s23, 1
        %s308 = scalar_select %p307, %s23, 1
        %p309 = scmp.lt.s32.totalorder %s306, 7
        %s310 = scalar_select %p309, %s306, 7
        %s311 = smul.addr %s308, 8
        %s312 = sadd.s32 %s310, %s311
        %s313 = smul.addr %s312, 8
        %s314 = scalar_lea.vmem %s0, %s313
        %s315 = smul.u32 8, %s24
      $region44: #{tpu_custom_call.1} parent=39 // pred_fallthru
        _
      // Predicated region
      $region45: #{tpu_custom_call.1} parent=39 // pred_check
        %p316 = pneg %p78
      $region46: #{tpu_custom_call.1} parent=39 // pred_check_branch
        %318 = sbr.rel (%p316) target = $region48
      $region47: #{tpu_custom_call.1} parent=39 // pred_region
        %s319 = smul.u32 8, %s24
        %p320 = scmp.lt.s32.totalorder %s23, 1
        %s321 = scalar_select %p320, %s23, 1
        %p322 = scmp.lt.s32.totalorder %s319, 7
        %s323 = scalar_select %p322, %s319, 7
        %s324 = smul.addr %s321, 8
        %s325 = sadd.s32 %s323, %s324
        %s326 = smul.addr %s325, 8
        %s327 = scalar_lea.vmem %s1, %s326
        %s328 = smul.u32 8, %s24
      $region48: #{tpu_custom_call.1} parent=39 // pred_fallthru
        _
    $region40: #{tpu_custom_call.1} parent=5 // pred_fallthru
      _
    %p329 = scmp.le.s32.totalorder 1, %s16
    %p330 = scmp.lt.s32.totalorder %s16, 3
    %p331 = pnand %p329, %p330
    %p332 = pneg %p331
    // Predicated region
    $region49: #{tpu_custom_call.1} parent=5 // pred_check
      _
    $region50: #{tpu_custom_call.1} parent=5 // pred_check_branch
      %334 = sbr.rel (%p331) target = $region52
    $region51: #{tpu_custom_call.1} parent=5 // pred_region
      %s335 = ssub.s32 %s16, 1
      %s336 = smul.u32 8, %s26
      %p337 = scmp.lt.s32.totalorder %s25, 1
      %s338 = scalar_select %p337, %s25, 1
      %p339 = scmp.lt.s32.totalorder %s336, 7
      %s340 = scalar_select %p339, %s336, 7
      %s341 = smul.addr %s338, 8
      %s342 = sadd.s32 %s340, %s341
      %s343 = smul.addr %s342, 8
      %s344 = scalar_lea.vmem %s0, %s343
      %p345 = pneg %p56
      %p346 = pneg %p53
      %s347 = smul.u32 8, %s26
      %p348 = scmp.lt.s32.totalorder %s25, 1
      %s349 = scalar_select %p348, %s25, 1
      %p350 = scmp.lt.s32.totalorder %s347, 7
      %s351 = scalar_select %p350, %s347, 7
      %s352 = smul.addr %s349, 8
      %s353 = sadd.s32 %s351, %s352
      %s354 = smul.addr %s353, 8
      %s355 = scalar_lea.vmem %s1, %s354
      %p356 = pneg %p84
      %p357 = pneg %p81
      %p358 = pneg %p105
      %p359 = pneg %p102
      %p360 = pneg %p126
      %p361 = pneg %p123
      %p362 = pneg %p147
      %p363 = pneg %p144
      %p364 = pneg %p168
      %p365 = pneg %p165
      %p366 = pneg %p189
      %p367 = pneg %p186
      %p368 = pneg %p210
      %p369 = pneg %p207
      %p370 = pneg %p238
      %p371 = pneg %p235
      %s372 = smul.u32 8, %s26
      %p373 = scmp.lt.s32.totalorder %s25, 1
      %s374 = scalar_select %p373, %s25, 1
      %p375 = scmp.lt.s32.totalorder %s372, 7
      %s376 = scalar_select %p375, %s372, 7
      %s377 = smul.addr %s374, 8
      %s378 = sadd.s32 %s376, %s377
      %s379 = smul.addr %s378, 4
      %s380 = scalar_lea.vmem %s8, %s379
      %p381 = pneg %p266
      %p382 = pneg %p263
      %s383 = smul.u32 8, %s26
      %p384 = scmp.lt.s32.totalorder %s25, 1
      %s385 = scalar_select %p384, %s25, 1
      %p386 = scmp.lt.s32.totalorder %s383, 7
      %s387 = scalar_select %p386, %s383, 7
      %s388 = smul.addr %s385, 8
      %s389 = sadd.s32 %s387, %s388
      %s390 = smul.addr %s389, 4
      %s391 = scalar_lea.vmem %s9, %s390
      %s392 = smul.u32 8, %s26
      %p393 = scmp.lt.s32.totalorder %s25, 1
      %s394 = scalar_select %p393, %s25, 1
      %p395 = scmp.lt.s32.totalorder %s392, 7
      %s396 = scalar_select %p395, %s392, 7
      %s397 = smul.addr %s394, 8
      %s398 = sadd.s32 %s396, %s397
      %s399 = smul.addr %s398, 8
      %s400 = scalar_lea.vmem %s0, %s399
      %s401 = smul.u32 8, %s26
      %s402 = smul.u32 8, %s26
      %p403 = scmp.lt.s32.totalorder %s25, 1
      %s404 = scalar_select %p403, %s25, 1
      %p405 = scmp.lt.s32.totalorder %s402, 7
      %s406 = scalar_select %p405, %s402, 7
      %s407 = smul.addr %s404, 8
      %s408 = sadd.s32 %s406, %s407
      %s409 = smul.addr %s408, 8
      %s410 = scalar_lea.vmem %s1, %s409
      %s411 = smul.u32 8, %s26
      %s412 = smul.u32 8, %s26
      %p413 = scmp.lt.s32.totalorder %s25, 1
      %s414 = scalar_select %p413, %s25, 1
      %p415 = scmp.lt.s32.totalorder %s412, 7
      %s416 = scalar_select %p415, %s412, 7
      %s417 = smul.addr %s414, 8
      %s418 = sadd.s32 %s416, %s417
      %s419 = smul.addr %s418, 4
      %s420 = scalar_lea.vmem %s8, %s419
      %s421 = smul.u32 8, %s26
      %s422 = smul.u32 8, %s26
      %p423 = scmp.lt.s32.totalorder %s25, 1
      %s424 = scalar_select %p423, %s25, 1
      %p425 = scmp.lt.s32.totalorder %s422, 7
      %s426 = scalar_select %p425, %s422, 7
      %s427 = smul.addr %s424, 8
      %s428 = sadd.s32 %s426, %s427
      %s429 = smul.addr %s428, 4
      %s430 = scalar_lea.vmem %s9, %s429
      %s431 = smul.u32 8, %s26
      %v433 = vld [vmem:[%s400] sm:$0xff]
      %v434 = vld [vmem:[%s400 + $0x8] sm:$0xff]
      %v435 = vld [vmem:[%s400 + $0x10] sm:$0xff]
      %v436 = vld [vmem:[%s400 + $0x18] sm:$0xff]
      %v437 = vld [vmem:[%s400 + $0x20] sm:$0xff]
      %v438 = vld [vmem:[%s400 + $0x28] sm:$0xff]
      %v439 = vld [vmem:[%s400 + $0x30] sm:$0xff]
      %v440 = vld [vmem:[%s400 + $0x38] sm:$0xff]
      %vm441 = vcmask 130048
      %v442 = vsel %vm441, %v433, 0.0
      %443 = vadd.xlane.f32.xlu0 %v442
      %v444 = vpop.xlane.xlu0 %443
      %v445 = vsel %vm441, %v434, 0.0
      %446 = vadd.xlane.f32.xlu0 %v445
      %v447 = vpop.xlane.xlu0 %446
      %v448 = vsel %vm441, %v435, 0.0
      %449 = vadd.xlane.f32.xlu0 %v448
      %v450 = vpop.xlane.xlu0 %449
      %v451 = vsel %vm441, %v436, 0.0
      %452 = vadd.xlane.f32.xlu0 %v451
      %v453 = vpop.xlane.xlu0 %452
      %v454 = vsel %vm441, %v437, 0.0
      %455 = vadd.xlane.f32.xlu0 %v454
      %v456 = vpop.xlane.xlu0 %455
      %v457 = vsel %vm441, %v438, 0.0
      %458 = vadd.xlane.f32.xlu0 %v457
      %v459 = vpop.xlane.xlu0 %458
      %v460 = vsel %vm441, %v439, 0.0
      %461 = vadd.xlane.f32.xlu0 %v460
      %v462 = vpop.xlane.xlu0 %461
      %v463 = vsel %vm441, %v440, 0.0
      %464 = vadd.xlane.f32.xlu0 %v463
      %v465 = vpop.xlane.xlu0 %464
      %v466 = vrcp.pop 16.0
      %v467 = vmul.f32 %v444, %v466
      %v468 = vmul.f32 %v447, %v466
      %v469 = vmul.f32 %v450, %v466
      %v470 = vmul.f32 %v453, %v466
      %v471 = vmul.f32 %v456, %v466
      %v472 = vmul.f32 %v459, %v466
      %v473 = vmul.f32 %v462, %v466
      %v474 = vmul.f32 %v465, %v466
      %v475 = vsub.f32 %v433, %v467
      %v476 = vsub.f32 %v434, %v468
      %v477 = vsub.f32 %v435, %v469
      %v478 = vsub.f32 %v436, %v470
      %v479 = vsub.f32 %v437, %v471
      %v480 = vsub.f32 %v438, %v472
      %v481 = vsub.f32 %v439, %v473
      %v482 = vsub.f32 %v440, %v474
      %v483 = vmul.f32 %v475, %v475
      %v484 = vmul.f32 %v476, %v476
      %v485 = vmul.f32 %v477, %v477
      %v486 = vmul.f32 %v478, %v478
      %v487 = vmul.f32 %v479, %v479
      %v488 = vmul.f32 %v480, %v480
      %v489 = vmul.f32 %v481, %v481
      %v490 = vmul.f32 %v482, %v482
      %v491 = vsel %vm441, %v483, 0.0
      %492 = vadd.xlane.f32.xlu0 %v491
      %v493 = vpop.xlane.xlu0 %492
      %v494 = vsel %vm441, %v484, 0.0
      %495 = vadd.xlane.f32.xlu0 %v494
      %v496 = vpop.xlane.xlu0 %495
      %v497 = vsel %vm441, %v485, 0.0
      %498 = vadd.xlane.f32.xlu0 %v497
      %v499 = vpop.xlane.xlu0 %498
      %v500 = vsel %vm441, %v486, 0.0
      %501 = vadd.xlane.f32.xlu0 %v500
      %v502 = vpop.xlane.xlu0 %501
      %v503 = vsel %vm441, %v487, 0.0
      %504 = vadd.xlane.f32.xlu0 %v503
      %v505 = vpop.xlane.xlu0 %504
      %v506 = vsel %vm441, %v488, 0.0
      %507 = vadd.xlane.f32.xlu0 %v506
      %v508 = vpop.xlane.xlu0 %507
      %v509 = vsel %vm441, %v489, 0.0
      %510 = vadd.xlane.f32.xlu0 %v509
      %v511 = vpop.xlane.xlu0 %510
      %v512 = vsel %vm441, %v490, 0.0
      %513 = vadd.xlane.f32.xlu0 %v512
      %v514 = vpop.xlane.xlu0 %513
      %v515 = vmul.f32 %v493, %v466
      %v516 = vmul.f32 %v496, %v466
      %v517 = vmul.f32 %v499, %v466
      %v518 = vmul.f32 %v502, %v466
      %v519 = vmul.f32 %v505, %v466
      %v520 = vmul.f32 %v508, %v466
      %v521 = vmul.f32 %v511, %v466
      %v522 = vmul.f32 %v514, %v466
      %v523 = vadd.f32 %v515, 1e-05
      %v524 = vadd.f32 %v516, 1e-05
      %v525 = vadd.f32 %v517, 1e-05
      %v526 = vadd.f32 %v518, 1e-05
      %v527 = vadd.f32 %v519, 1e-05
      %v528 = vadd.f32 %v520, 1e-05
      %v529 = vadd.f32 %v521, 1e-05
      %v530 = vadd.f32 %v522, 1e-05
      %v531 = vrsqrt.pop %v523
      %v532 = vrsqrt.pop %v524
      %v533 = vrsqrt.pop %v525
      %v534 = vrsqrt.pop %v526
      %v535 = vrsqrt.pop %v527
      %v536 = vrsqrt.pop %v528
      %v537 = vrsqrt.pop %v529
      %v538 = vrsqrt.pop %v530
      %v539 = vmul.f32 %v475, %v531
      %v540 = vmul.f32 %v476, %v532
      %v541 = vmul.f32 %v477, %v533
      %v542 = vmul.f32 %v478, %v534
      %v543 = vmul.f32 %v479, %v535
      %v544 = vmul.f32 %v480, %v536
      %v545 = vmul.f32 %v481, %v537
      %v546 = vmul.f32 %v482, %v538
      %v547 = vld [vmem:[%s2] sm:$0x1]
      %v549 = vlaneseq
      %v550 = vshrl.u32 %v549, 7
      %v551 = vsub.s32 0, %v550
      %v552 = vrot.slane %v547, %v551
      %v554 = vmul.f32 %v539, %v552
      %v555 = vmul.f32 %v540, %v552
      %v556 = vmul.f32 %v541, %v552
      %v557 = vmul.f32 %v542, %v552
      %v558 = vmul.f32 %v543, %v552
      %v559 = vmul.f32 %v544, %v552
      %v560 = vmul.f32 %v545, %v552
      %v561 = vmul.f32 %v546, %v552
      %v562 = vld [vmem:[%s3] sm:$0x1]
      %v564 = vlaneseq
      %v565 = vshrl.u32 %v564, 7
      %v566 = vsub.s32 0, %v565
      %v567 = vrot.slane %v562, %v566
      %v569 = vadd.f32 %v554, %v567
      %v570 = vadd.f32 %v555, %v567
      %v571 = vadd.f32 %v556, %v567
      %v572 = vadd.f32 %v557, %v567
      %v573 = vadd.f32 %v558, %v567
      %v574 = vadd.f32 %v559, %v567
      %v575 = vadd.f32 %v560, %v567
      %v576 = vadd.f32 %v561, %v567
      %v577 = vpack.c.bf16 %v570, %v569
      %v578 = vpack.c.bf16 %v572, %v571
      %v579 = vpack.c.bf16 %v574, %v573
      %v580 = vpack.c.bf16 %v576, %v575
      %v581 = vld [vmem:[%s410] sm:$0xff]
      %v582 = vld [vmem:[%s410 + $0x8] sm:$0xff]
      %v583 = vld [vmem:[%s410 + $0x10] sm:$0xff]
      %v584 = vld [vmem:[%s410 + $0x18] sm:$0xff]
      %v585 = vld [vmem:[%s410 + $0x20] sm:$0xff]
      %v586 = vld [vmem:[%s410 + $0x28] sm:$0xff]
      %v587 = vld [vmem:[%s410 + $0x30] sm:$0xff]
      %v588 = vld [vmem:[%s410 + $0x38] sm:$0xff]
      %v589 = vsel %vm441, %v581, 0.0
      %590 = vadd.xlane.f32.xlu0 %v589
      %v591 = vpop.xlane.xlu0 %590
      %v592 = vsel %vm441, %v582, 0.0
      %593 = vadd.xlane.f32.xlu0 %v592
      %v594 = vpop.xlane.xlu0 %593
      %v595 = vsel %vm441, %v583, 0.0
      %596 = vadd.xlane.f32.xlu0 %v595
      %v597 = vpop.xlane.xlu0 %596
      %v598 = vsel %vm441, %v584, 0.0
      %599 = vadd.xlane.f32.xlu0 %v598
      %v600 = vpop.xlane.xlu0 %599
      %v601 = vsel %vm441, %v585, 0.0
      %602 = vadd.xlane.f32.xlu0 %v601
      %v603 = vpop.xlane.xlu0 %602
      %v604 = vsel %vm441, %v586, 0.0
      %605 = vadd.xlane.f32.xlu0 %v604
      %v606 = vpop.xlane.xlu0 %605
      %v607 = vsel %vm441, %v587, 0.0
      %608 = vadd.xlane.f32.xlu0 %v607
      %v609 = vpop.xlane.xlu0 %608
      %v610 = vsel %vm441, %v588, 0.0
      %611 = vadd.xlane.f32.xlu0 %v610
      %v612 = vpop.xlane.xlu0 %611
      %v613 = vmul.f32 %v591, %v466
      %v614 = vmul.f32 %v594, %v466
      %v615 = vmul.f32 %v597, %v466
      %v616 = vmul.f32 %v600, %v466
      %v617 = vmul.f32 %v603, %v466
      %v618 = vmul.f32 %v606, %v466
      %v619 = vmul.f32 %v609, %v466
      %v620 = vmul.f32 %v612, %v466
      %v621 = vsub.f32 %v581, %v613
      %v622 = vsub.f32 %v582, %v614
      %v623 = vsub.f32 %v583, %v615
      %v624 = vsub.f32 %v584, %v616
      %v625 = vsub.f32 %v585, %v617
      %v626 = vsub.f32 %v586, %v618
      %v627 = vsub.f32 %v587, %v619
      %v628 = vsub.f32 %v588, %v620
      %v629 = vmul.f32 %v621, %v621
      %v630 = vmul.f32 %v622, %v622
      %v631 = vmul.f32 %v623, %v623
      %v632 = vmul.f32 %v624, %v624
      %v633 = vmul.f32 %v625, %v625
      %v634 = vmul.f32 %v626, %v626
      %v635 = vmul.f32 %v627, %v627
      %v636 = vmul.f32 %v628, %v628
      %v637 = vsel %vm441, %v629, 0.0
      %638 = vadd.xlane.f32.xlu0 %v637
      %v639 = vpop.xlane.xlu0 %638
      %v640 = vsel %vm441, %v630, 0.0
      %641 = vadd.xlane.f32.xlu0 %v640
      %v642 = vpop.xlane.xlu0 %641
      %v643 = vsel %vm441, %v631, 0.0
      %644 = vadd.xlane.f32.xlu0 %v643
      %v645 = vpop.xlane.xlu0 %644
      %v646 = vsel %vm441, %v632, 0.0
      %647 = vadd.xlane.f32.xlu0 %v646
      %v648 = vpop.xlane.xlu0 %647
      %v649 = vsel %vm441, %v633, 0.0
      %650 = vadd.xlane.f32.xlu0 %v649
      %v651 = vpop.xlane.xlu0 %650
      %v652 = vsel %vm441, %v634, 0.0
      %653 = vadd.xlane.f32.xlu0 %v652
      %v654 = vpop.xlane.xlu0 %653
      %v655 = vsel %vm441, %v635, 0.0
      %656 = vadd.xlane.f32.xlu0 %v655
      %v657 = vpop.xlane.xlu0 %656
      %v658 = vsel %vm441, %v636, 0.0
      %659 = vadd.xlane.f32.xlu0 %v658
      %v660 = vpop.xlane.xlu0 %659
      %v661 = vmul.f32 %v639, %v466
      %v662 = vmul.f32 %v642, %v466
      %v663 = vmul.f32 %v645, %v466
      %v664 = vmul.f32 %v648, %v466
      %v665 = vmul.f32 %v651, %v466
      %v666 = vmul.f32 %v654, %v466
      %v667 = vmul.f32 %v657, %v466
      %v668 = vmul.f32 %v660, %v466
      %v669 = vadd.f32 %v661, 1e-05
      %v670 = vadd.f32 %v662, 1e-05
      %v671 = vadd.f32 %v663, 1e-05
      %v672 = vadd.f32 %v664, 1e-05
      %v673 = vadd.f32 %v665, 1e-05
      %v674 = vadd.f32 %v666, 1e-05
      %v675 = vadd.f32 %v667, 1e-05
      %v676 = vadd.f32 %v668, 1e-05
      %v677 = vrsqrt.pop %v669
      %v678 = vrsqrt.pop %v670
      %v679 = vrsqrt.pop %v671
      %v680 = vrsqrt.pop %v672
      %v681 = vrsqrt.pop %v673
      %v682 = vrsqrt.pop %v674
      %v683 = vrsqrt.pop %v675
      %v684 = vrsqrt.pop %v676
      %v685 = vmul.f32 %v621, %v677
      %v686 = vmul.f32 %v622, %v678
      %v687 = vmul.f32 %v623, %v679
      %v688 = vmul.f32 %v624, %v680
      %v689 = vmul.f32 %v625, %v681
      %v690 = vmul.f32 %v626, %v682
      %v691 = vmul.f32 %v627, %v683
      %v692 = vmul.f32 %v628, %v684
      %v693 = vld [vmem:[%s4] sm:$0x1]
      %v695 = vlaneseq
      %v696 = vshrl.u32 %v695, 7
      %v697 = vsub.s32 0, %v696
      %v698 = vrot.slane %v693, %v697
      %v700 = vmul.f32 %v685, %v698
      %v701 = vmul.f32 %v686, %v698
      %v702 = vmul.f32 %v687, %v698
      %v703 = vmul.f32 %v688, %v698
      %v704 = vmul.f32 %v689, %v698
      %v705 = vmul.f32 %v690, %v698
      %v706 = vmul.f32 %v691, %v698
      %v707 = vmul.f32 %v692, %v698
      %v708 = vld [vmem:[%s5] sm:$0x1]
      %v710 = vlaneseq
      %v711 = vshrl.u32 %v710, 7
      %v712 = vsub.s32 0, %v711
      %v713 = vrot.slane %v708, %v712
      %v715 = vadd.f32 %v700, %v713
      %v716 = vadd.f32 %v701, %v713
      %v717 = vadd.f32 %v702, %v713
      %v718 = vadd.f32 %v703, %v713
      %v719 = vadd.f32 %v704, %v713
      %v720 = vadd.f32 %v705, %v713
      %v721 = vadd.f32 %v706, %v713
      %v722 = vadd.f32 %v707, %v713
      %v723 = vpack.c.bf16 %v716, %v715
      %v724 = vpack.c.bf16 %v718, %v717
      %v725 = vpack.c.bf16 %v720, %v719
      %v726 = vpack.c.bf16 %v722, %v721
      %v727 = vld [vmem:[%s6] sm:$0xf]
      %v728 = vld [vmem:[%s6 + $0x4] sm:$0xf]
      %v731 = vunpack.c.l.b16 %v727
      %v732 = vunpack.c.l.b16 %v728
      %v733 = vpack.c.b16 %v732, %v731
      %v736 = vsel %vm441, %v577, 0
      %v739 = vsel %vm441, %v578, 0
      %v742 = vsel %vm441, %v579, 0
      %v745 = vsel %vm441, %v580, 0
      %747 = vmatprep.subr.bf16.mxu0 0
      %748 = vmatpush1.bf16.msra.mxu0 %v733
      %749 = vmatprep.subr.bf16.mxu0 0
      %750 = vmatpush1.bf16.msra.mxu0 0
      %751 = vmatprep.subr.bf16.mxu0 0
      %752 = vmatpush1.bf16.msra.mxu0 0
      %753 = vmatprep.subr.bf16.mxu0 0
      %754 = vmatpush1.bf16.msra.mxu0 0
      %755 = vmatprep.subr.bf16.mxu0 0
      %756 = vmatpush1.bf16.msra.mxu0 0
      %757 = vmatprep.subr.bf16.mxu0 0
      %758 = vmatpush1.bf16.msra.mxu0 0
      %759 = vmatprep.subr.bf16.mxu0 0
      %760 = vmatpush1.bf16.msra.mxu0 0
      %761 = vmatprep.subr.bf16.mxu0 0
      %762 = vmatpush1.bf16.msra.mxu0 0
      %763 = vmatprep.subr.bf16.mxu0 0
      %764 = vmatpush1.bf16.msra.mxu0 0
      %765 = vmatprep.subr.bf16.mxu0 0
      %766 = vmatpush1.bf16.msra.mxu0 0
      %767 = vmatprep.subr.bf16.mxu0 0
      %768 = vmatpush1.bf16.msra.mxu0 0
      %769 = vmatprep.subr.bf16.mxu0 0
      %770 = vmatpush1.bf16.msra.mxu0 0
      %771 = vmatprep.subr.bf16.mxu0 0
      %772 = vmatpush1.bf16.msra.mxu0 0
      %773 = vmatprep.subr.bf16.mxu0 0
      %774 = vmatpush1.bf16.msra.mxu0 0
      %775 = vmatprep.subr.bf16.mxu0 0
      %776 = vmatpush1.bf16.msra.mxu0 0
      %777 = vmatprep.subr.bf16.mxu0 0
      %778 = vmatpush1.bf16.msra.mxu0 0
      %779 = vmatprep.mubr.bf16.mxu0 0
      %780 = vmatmul.mubr.bf16.gmra.mrb[0].mxu0 %v736
      %v781 = vpop.f32.mrb[0].mxu0
      %v782 = vadd.f32 0.0, %v781
      %v783 = vpop.f32.mrb[0].mxu0
      %v784 = vpop.f32.mrb[0].mxu0
      %v785 = vadd.f32 0.0, %v784
      %v786 = vpop.f32.mrb[0].mxu0
      %787 = vmatprep.mubr.bf16.mxu0 0
      %788 = vmatmul.mubr.bf16.gmra.mrb[0].mxu0 %v739
      %v789 = vpop.f32.mrb[0].mxu0
      %v790 = vadd.f32 0.0, %v789
      %v791 = vpop.f32.mrb[0].mxu0
      %v792 = vpop.f32.mrb[0].mxu0
      %v793 = vadd.f32 0.0, %v792
      %v794 = vpop.f32.mrb[0].mxu0
      %795 = vmatprep.mubr.bf16.mxu0 0
      %796 = vmatmul.mubr.bf16.gmra.mrb[0].mxu0 %v742
      %v797 = vpop.f32.mrb[0].mxu0
      %v798 = vadd.f32 0.0, %v797
      %v799 = vpop.f32.mrb[0].mxu0
      %v800 = vpop.f32.mrb[0].mxu0
      %v801 = vadd.f32 0.0, %v800
      %v802 = vpop.f32.mrb[0].mxu0
      %803 = vmatprep.mubr.bf16.mxu0 0
      %804 = vmatmul.mubr.bf16.gmra.mrb[0].mxu0 %v745
      %v805 = vpop.f32.mrb[0].mxu0
      %v806 = vadd.f32 0.0, %v805
      %v807 = vpop.f32.mrb[0].mxu0
      %v808 = vpop.f32.mrb[0].mxu0
      %v809 = vadd.f32 0.0, %v808
      %v810 = vpop.f32.mrb[0].mxu0
      %811 = vdwg.mxu0
      %v812 = vpack.c.bf16 %v785, %v782
      %v813 = vpack.c.bf16 %v793, %v790
      %v814 = vpack.c.bf16 %v801, %v798
      %v815 = vpack.c.bf16 %v809, %v806
      %v820 = vunpack.c.l.b16 %v812
      %v821 = vunpack.c.h.b16 %v812
      %v822 = vunpack.c.l.b16 %v813
      %v823 = vunpack.c.h.b16 %v813
      %v824 = vunpack.c.l.b16 %v814
      %v825 = vunpack.c.h.b16 %v814
      %v826 = vunpack.c.l.b16 %v815
      %v827 = vunpack.c.h.b16 %v815
      %v828 = vpack.c.b16 %v820, %v820
      %v829 = vpack.c.b16 %v821, %v821
      %v830 = vpack.c.b16 %v822, %v822
      %v831 = vpack.c.b16 %v823, %v823
      %v832 = vpack.c.b16 %v824, %v824
      %v833 = vpack.c.b16 %v825, %v825
      %v834 = vpack.c.b16 %v826, %v826
      %v835 = vpack.c.b16 %v827, %v827
      %vm844 = vcmask 257024
      %845 = vst.msk [vmem:[%s420] sm:$0xf] %vm844, %v828
      %846 = vst.msk [vmem:[%s420 + $0x4] sm:$0xf] %vm844, %v829
      %847 = vst.msk [vmem:[%s420 + $0x8] sm:$0xf] %vm844, %v830
      %848 = vst.msk [vmem:[%s420 + $0xc] sm:$0xf] %vm844, %v831
      %849 = vst.msk [vmem:[%s420 + $0x10] sm:$0xf] %vm844, %v832
      %850 = vst.msk [vmem:[%s420 + $0x14] sm:$0xf] %vm844, %v833
      %851 = vst.msk [vmem:[%s420 + $0x18] sm:$0xf] %vm844, %v834
      %852 = vst.msk [vmem:[%s420 + $0x1c] sm:$0xf] %vm844, %v835
      %v853 = vld [vmem:[%s7] sm:$0xf]
      %v854 = vld [vmem:[%s7 + $0x4] sm:$0xf]
      %v857 = vunpack.c.l.b16 %v853
      %v858 = vunpack.c.l.b16 %v854
      %v859 = vpack.c.b16 %v858, %v857
      %v862 = vsel %vm441, %v723, 0
      %v865 = vsel %vm441, %v724, 0
      %v868 = vsel %vm441, %v725, 0
      %v871 = vsel %vm441, %v726, 0
      %873 = vmatprep.subr.bf16.mxu0 0
      %874 = vmatpush1.bf16.msra.mxu0 %v859
      %875 = vmatprep.subr.bf16.mxu0 0
      %876 = vmatpush1.bf16.msra.mxu0 0
      %877 = vmatprep.subr.bf16.mxu0 0
      %878 = vmatpush1.bf16.msra.mxu0 0
      %879 = vmatprep.subr.bf16.mxu0 0
      %880 = vmatpush1.bf16.msra.mxu0 0
      %881 = vmatprep.subr.bf16.mxu0 0
      %882 = vmatpush1.bf16.msra.mxu0 0
      %883 = vmatprep.subr.bf16.mxu0 0
      %884 = vmatpush1.bf16.msra.mxu0 0
      %885 = vmatprep.subr.bf16.mxu0 0
      %886 = vmatpush1.bf16.msra.mxu0 0
      %887 = vmatprep.subr.bf16.mxu0 0
      %888 = vmatpush1.bf16.msra.mxu0 0
      %889 = vmatprep.subr.bf16.mxu0 0
      %890 = vmatpush1.bf16.msra.mxu0 0
      %891 = vmatprep.subr.bf16.mxu0 0
      %892 = vmatpush1.bf16.msra.mxu0 0
      %893 = vmatprep.subr.bf16.mxu0 0
      %894 = vmatpush1.bf16.msra.mxu0 0
      %895 = vmatprep.subr.bf16.mxu0 0
      %896 = vmatpush1.bf16.msra.mxu0 0
      %897 = vmatprep.subr.bf16.mxu0 0
      %898 = vmatpush1.bf16.msra.mxu0 0
      %899 = vmatprep.subr.bf16.mxu0 0
      %900 = vmatpush1.bf16.msra.mxu0 0
      %901 = vmatprep.subr.bf16.mxu0 0
      %902 = vmatpush1.bf16.msra.mxu0 0
      %903 = vmatprep.subr.bf16.mxu0 0
      %904 = vmatpush1.bf16.msra.mxu0 0
      %905 = vmatprep.mubr.bf16.mxu0 0
      %906 = vmatmul.mubr.bf16.gmra.mrb[0].mxu0 %v862
      %v907 = vpop.f32.mrb[0].mxu0
      %v908 = vadd.f32 0.0, %v907
      %v909 = vpop.f32.mrb[0].mxu0
      %v910 = vpop.f32.mrb[0].mxu0
      %v911 = vadd.f32 0.0, %v910
      %v912 = vpop.f32.mrb[0].mxu0
      %913 = vmatprep.mubr.bf16.mxu0 0
      %914 = vmatmul.mubr.bf16.gmra.mrb[0].mxu0 %v865
      %v915 = vpop.f32.mrb[0].mxu0
      %v916 = vadd.f32 0.0, %v915
      %v917 = vpop.f32.mrb[0].mxu0
      %v918 = vpop.f32.mrb[0].mxu0
      %v919 = vadd.f32 0.0, %v918
      %v920 = vpop.f32.mrb[0].mxu0
      %921 = vmatprep.mubr.bf16.mxu0 0
      %922 = vmatmul.mubr.bf16.gmra.mrb[0].mxu0 %v868
      %v923 = vpop.f32.mrb[0].mxu0
      %v924 = vadd.f32 0.0, %v923
      %v925 = vpop.f32.mrb[0].mxu0
      %v926 = vpop.f32.mrb[0].mxu0
      %v927 = vadd.f32 0.0, %v926
      %v928 = vpop.f32.mrb[0].mxu0
      %929 = vmatprep.mubr.bf16.mxu0 0
      %930 = vmatmul.mubr.bf16.gmra.mrb[0].mxu0 %v871
      %v931 = vpop.f32.mrb[0].mxu0
      %v932 = vadd.f32 0.0, %v931
      %v933 = vpop.f32.mrb[0].mxu0
      %v934 = vpop.f32.mrb[0].mxu0
      %v935 = vadd.f32 0.0, %v934
      %v936 = vpop.f32.mrb[0].mxu0
      %937 = vdwg.mxu0
      %v938 = vpack.c.bf16 %v911, %v908
      %v939 = vpack.c.bf16 %v919, %v916
      %v940 = vpack.c.bf16 %v927, %v924
      %v941 = vpack.c.bf16 %v935, %v932
      %v946 = vunpack.c.l.b16 %v938
      %v947 = vunpack.c.h.b16 %v938
      %v948 = vunpack.c.l.b16 %v939
      %v949 = vunpack.c.h.b16 %v939
      %v950 = vunpack.c.l.b16 %v940
      %v951 = vunpack.c.h.b16 %v940
      %v952 = vunpack.c.l.b16 %v941
      %v953 = vunpack.c.h.b16 %v941
      %v954 = vpack.c.b16 %v946, %v946
      %v955 = vpack.c.b16 %v947, %v947
      %v956 = vpack.c.b16 %v948, %v948
      %v957 = vpack.c.b16 %v949, %v949
      %v958 = vpack.c.b16 %v950, %v950
      %v959 = vpack.c.b16 %v951, %v951
      %v960 = vpack.c.b16 %v952, %v952
      %v961 = vpack.c.b16 %v953, %v953
      %vm970 = vcmask 125952
      %971 = vst.msk [vmem:[%s430] sm:$0xf] %vm970, %v954
      %972 = vst.msk [vmem:[%s430 + $0x4] sm:$0xf] %vm970, %v955
      %973 = vst.msk [vmem:[%s430 + $0x8] sm:$0xf] %vm970, %v956
      %974 = vst.msk [vmem:[%s430 + $0xc] sm:$0xf] %vm970, %v957
      %975 = vst.msk [vmem:[%s430 + $0x10] sm:$0xf] %vm970, %v958
      %976 = vst.msk [vmem:[%s430 + $0x14] sm:$0xf] %vm970, %v959
      %977 = vst.msk [vmem:[%s430 + $0x18] sm:$0xf] %vm970, %v960
      %978 = vst.msk [vmem:[%s430 + $0x1c] sm:$0xf] %vm970, %v961
      %s979 = smul.u32 8, %s26
      %p980 = scmp.lt.s32.totalorder %s25, 1
      %s981 = scalar_select %p980, %s25, 1
      %p982 = scmp.lt.s32.totalorder %s979, 7
      %s983 = scalar_select %p982, %s979, 7
      %s984 = smul.addr %s981, 8
      %s985 = sadd.s32 %s983, %s984
      %s986 = smul.addr %s985, 4
      %s987 = scalar_lea.vmem %s8, %s986
      %s988 = smul.u32 8, %s26
      %p989 = scmp.lt.s32.totalorder %s25, 1
      %s990 = scalar_select %p989, %s25, 1
      %p991 = scmp.lt.s32.totalorder %s988, 7
      %s992 = scalar_select %p991, %s988, 7
      %s993 = smul.addr %s990, 8
      %s994 = sadd.s32 %s992, %s993
      %s995 = smul.addr %s994, 4
      %s996 = scalar_lea.vmem %s9, %s995
      // Predicated region
      $region53: #{tpu_custom_call.1} parent=51 // pred_check
        %p997 = pneg %p235
      $region54: #{tpu_custom_call.1} parent=51 // pred_check_branch
        %999 = sbr.rel (%p997) target = $region56
      $region55: #{tpu_custom_call.1} parent=51 // pred_region
        %s1000 = smul.u32 8, %s26
      $region56: #{tpu_custom_call.1} parent=51 // pred_fallthru
        _
      // Predicated region
      $region57: #{tpu_custom_call.1} parent=51 // pred_check
        %p1001 = pneg %p263
      $region58: #{tpu_custom_call.1} parent=51 // pred_check_branch
        %1003 = sbr.rel (%p1001) target = $region60
      $region59: #{tpu_custom_call.1} parent=51 // pred_region
        %s1004 = smul.u32 8, %s26
      $region60: #{tpu_custom_call.1} parent=51 // pred_fallthru
        _
    $region52: #{tpu_custom_call.1} parent=5 // pred_fallthru
      _
    %p1005 = scmp.le.s32.totalorder 2, %s16
    // Predicated region
    $region61: #{tpu_custom_call.1} parent=5 // pred_check
      %p1006 = pneg %p1005
    $region62: #{tpu_custom_call.1} parent=5 // pred_check_branch
      %1008 = sbr.rel (%p1006) target = $region64
    $region63: #{tpu_custom_call.1} parent=5 // pred_region
      %s1009 = ssub.s32 %s16, 2
      // Predicated region
      $region65: #{tpu_custom_call.1} parent=63 // pred_check
        %p1010 = pneg %p241
      $region66: #{tpu_custom_call.1} parent=63 // pred_check_branch
        %1012 = sbr.rel (%p1010) target = $region68
      $region67: #{tpu_custom_call.1} parent=63 // pred_region
        %s1013 = smul.u32 8, %s28
        %p1014 = scmp.lt.s32.totalorder %s27, 1
        %s1015 = scalar_select %p1014, %s27, 1
        %p1016 = scmp.lt.s32.totalorder %s1013, 7
        %s1017 = scalar_select %p1016, %s1013, 7
        %s1018 = smul.addr %s1015, 8
        %s1019 = sadd.s32 %s1017, %s1018
        %s1020 = smul.addr %s1019, 4
        %s1021 = scalar_lea.vmem %s8, %s1020
      $region68: #{tpu_custom_call.1} parent=63 // pred_fallthru
        _
      // Predicated region
      $region69: #{tpu_custom_call.1} parent=63 // pred_check
        %p1022 = pneg %p269
      $region70: #{tpu_custom_call.1} parent=63 // pred_check_branch
        %1024 = sbr.rel (%p1022) target = $region72
      $region71: #{tpu_custom_call.1} parent=63 // pred_region
        %s1025 = smul.u32 8, %s28
        %p1026 = scmp.lt.s32.totalorder %s27, 1
        %s1027 = scalar_select %p1026, %s27, 1
        %p1028 = scmp.lt.s32.totalorder %s1025, 7
        %s1029 = scalar_select %p1028, %s1025, 7
        %s1030 = smul.addr %s1027, 8
        %s1031 = sadd.s32 %s1029, %s1030
        %s1032 = smul.addr %s1031, 4
        %s1033 = scalar_lea.vmem %s9, %s1032
      $region72: #{tpu_custom_call.1} parent=63 // pred_fallthru
        _
    $region64: #{tpu_custom_call.1} parent=5 // pred_fallthru
      _
  $region6: #{tpu_custom_call.1} parent=0 // loop_footer
    %s20 = sadd.s32 1, %s16
  $region7: #{tpu_custom_call.1} parent=0 // loop_footer_branch
    %15 = sbr.rel target = $region3
  $region8: #{tpu_custom_call.1} parent=0 // loop_exit
    _

</llo_original>
